<compile_context>
chip_gen: v5e
topology: v5e:2x2
jax: 0.10.0
libtpu: 0.0.40
codegen_flags: <defaults>
</compile_context>

<pallas_src>
import functools

import numpy as np

import jax
import jax.numpy as jnp
from jax import lax
from jax.experimental import pallas as pl
from jax.experimental.pallas import tpu as pltpu

VMEM_LIMIT_BYTES = 32 * 1024 * 1024  # above all scoped defaults, safe on v5e/v6e/v7x


# ---------------------------------------------------------------------------
# Tiling / padding helpers
# ---------------------------------------------------------------------------
def _round_up(x, m):
    return ((x + m - 1) // m) * m


def _choose_tile(n):
    """Pick a lane/sublane-friendly tile from {512,256,128} minimizing padding."""
    best_t, best_pad = 128, _round_up(max(n, 1), 128)
    for t in (256, 512):
        p = _round_up(max(n, 1), t)
        if p < best_pad or (p == best_pad and t > best_t):
            best_t, best_pad = t, p
    return best_t, best_pad


def _reduce_tile(k):
    """Reduction-dim tile: largest of {512,256,128} dividing k, else full k."""
    for t in (512, 256, 128):
        if k % t == 0:
            return t
    return k


def _pad2(x, rows, cols, value=0):
    r, c = x.shape
    if r == rows and c == cols:
        return x
    return jnp.pad(x, ((0, rows - r), (0, cols - c)), constant_values=value)


# ---------------------------------------------------------------------------
# Kernel 1a: xw = x @ W   (row-tiled, reduction-tiled, bf16 MXU, f32 accumulate)
# ---------------------------------------------------------------------------
def _xw_kernel(x_ref, w_ref, o_ref, acc_ref):
    k = pl.program_id(1)

    @pl.when(k == 0)
    def _():
        acc_ref[...] = jnp.zeros_like(acc_ref)

    acc_ref[...] += jnp.dot(
        x_ref[...], w_ref[...], preferred_element_type=jnp.float32
    )

    @pl.when(k == pl.num_programs(1) - 1)
    def _():
        o_ref[...] = acc_ref[...].astype(o_ref.dtype)


def feature_matmul(x, w, *, tile, out_dtype=jnp.bfloat16):
    n_pad, kdim = x.shape
    out_dim = w.shape[1]
    tm = tile
    tk = _reduce_tile(kdim)
    return pl.pallas_call(
        _xw_kernel,
        out_shape=jax.ShapeDtypeStruct((n_pad, out_dim), out_dtype),
        grid_spec=pltpu.PrefetchScalarGridSpec(
            num_scalar_prefetch=0,
            grid=(n_pad // tm, kdim // tk),
            in_specs=[
                pl.BlockSpec((tm, tk), lambda i, k: (i, k)),
                pl.BlockSpec((tk, out_dim), lambda i, k: (k, 0)),
            ],
            out_specs=pl.BlockSpec((tm, out_dim), lambda i, k: (i, 0)),
            scratch_shapes=[pltpu.VMEM((tm, out_dim), jnp.float32)],
        ),
        compiler_params=pltpu.CompilerParams(
            dimension_semantics=("parallel", "arbitrary"),
            vmem_limit_bytes=VMEM_LIMIT_BYTES,
        ),
    )(x, w)


# ---------------------------------------------------------------------------
# Kernel 1b: h = act(adj @ xw)
#   * bf16 output + relu -> VMEM f32 scratch accumulator, cast on finalize
#   * f32 output, no relu -> accumulate directly into the resident output block
# ---------------------------------------------------------------------------
def _adj_kernel_scratch(adj_ref, xw_ref, o_ref, acc_ref, *, relu):
    k = pl.program_id(1)

    @pl.when(k == 0)
    def _():
        acc_ref[...] = jnp.zeros_like(acc_ref)

    acc_ref[...] += jnp.dot(
        adj_ref[...], xw_ref[...], preferred_element_type=jnp.float32
    )

    @pl.when(k == pl.num_programs(1) - 1)
    def _():
        h = acc_ref[...]
        if relu:
            h = jnp.maximum(h, 0.0)
        o_ref[...] = h.astype(o_ref.dtype)


def _adj_kernel_accout(adj_ref, xw_ref, o_ref):
    # Output block's index_map returns (i, 0) -> resident across k; accumulate
    # in place (saves the scratch copy + finalize store).
    k = pl.program_id(1)

    @pl.when(k == 0)
    def _():
        o_ref[...] = jnp.zeros_like(o_ref)

    o_ref[...] += jnp.dot(
        adj_ref[...], xw_ref[...], preferred_element_type=jnp.float32
    )


def adj_matmul(adj, xw, *, tile, relu, out_dtype):
    n_pad = adj.shape[0]
    out_dim = xw.shape[1]
    tm = tk = tile
    acc_in_out = (out_dtype == jnp.float32) and not relu
    if acc_in_out:
        kernel = _adj_kernel_accout
        scratch = []
    else:
        kernel = functools.partial(_adj_kernel_scratch, relu=relu)
        scratch = [pltpu.VMEM((tm, out_dim), jnp.float32)]
    return pl.pallas_call(
        kernel,
        out_shape=jax.ShapeDtypeStruct((n_pad, out_dim), out_dtype),
        grid_spec=pltpu.PrefetchScalarGridSpec(
            num_scalar_prefetch=0,
            grid=(n_pad // tm, n_pad // tk),
            in_specs=[
                pl.BlockSpec((tm, tk), lambda i, k: (i, k)),       # adj tile
                pl.BlockSpec((tk, out_dim), lambda i, k: (k, 0)),  # xw tile
            ],
            out_specs=pl.BlockSpec((tm, out_dim), lambda i, k: (i, 0)),
            scratch_shapes=scratch,
        ),
        compiler_params=pltpu.CompilerParams(
            dimension_semantics=("parallel", "arbitrary"),
            vmem_limit_bytes=VMEM_LIMIT_BYTES,
        ),
    )(adj, xw)


def gcn_layer(x_pad, w_pad, adj_pad, *, tile, relu, out_dtype):
    """out = act(adj @ (x @ W)) — cheap contraction order."""
    xw = feature_matmul(x_pad, w_pad, tile=tile, out_dtype=jnp.bfloat16)
    return adj_matmul(adj_pad, xw, tile=tile, relu=relu, out_dtype=out_dtype)


# ---------------------------------------------------------------------------
# Kernel 2: inner-product decoder + BCE(pos_weight) + accuracy,
#           streamed over (tile, tile) logit tiles; per-row-block partial sums.
# ---------------------------------------------------------------------------
def _recon_loss_kernel(labels_ref, zq_ref, zk_ref, out_ref, acc_sm, *, pos_weight):
    j = pl.program_id(1)

    @pl.when(j == 0)
    def _():
        acc_sm[0] = 0.0   # BCE partial sum for this row block
        acc_sm[1] = 0.0   # correct-prediction count for this row block

    y_i = labels_ref[...]            # int8, -1 marks padded entries
    valid = y_i >= 0
    y_bool = y_i > 0
    y = y_bool.astype(jnp.float32)

    # InnerProductDecoder (identity activation): logits tile = z_q @ z_k^T,
    # contracted without an explicit transpose; bf16 MXU, f32 accumulation.
    logits = lax.dot_general(
        zq_ref[...], zk_ref[...],
        dimension_numbers=(((1,), (1,)), ((), ())),
        preferred_element_type=jnp.float32)

    # BCEWithLogitsLoss(pos_weight), PyTorch-stable form, masked partial sum.
    log_weight = 1.0 + (pos_weight - 1.0) * y
    softplus_neg = jnp.log1p(jnp.exp(-jnp.abs(logits))) + jnp.maximum(-logits, 0.0)
    loss = (1.0 - y) * logits + log_weight * softplus_neg
    acc_sm[0] += jnp.sum(jnp.where(valid, loss, 0.0))

    # accuracy: sigmoid(x) >= 0.5  <=>  x >= 0   (no transcendental, no pred buffer)
    correct = jnp.logical_and((logits >= 0.0) == y_bool, valid)
    acc_sm[1] += jnp.sum(correct.astype(jnp.float32))

    @pl.when(j == pl.num_programs(1) - 1)
    def _():
        out_ref[0, 0] = acc_sm[0]
        out_ref[0, 1] = acc_sm[1]


# ---------------------------------------------------------------------------
# Forward wrapper (glue in plain JAX)
# ---------------------------------------------------------------------------
def our_model_vae_forward(features, adj, labels, params, eps, pos_weight, hidden2):
    n, f = features.shape
    tile, n_pad = _choose_tile(n)
    f_pad = _round_up(f, 128)

    # bf16 MXU operands (f32 accumulation in-kernel); pad to tile-friendly shapes.
    adj_bf16 = _pad2(adj.astype(jnp.bfloat16), n_pad, n_pad)
    feat_bf16 = _pad2(features.astype(jnp.bfloat16), n_pad, f_pad)
    w1 = _pad2(params["w1"].astype(jnp.bfloat16), f_pad, params["w1"].shape[1])

    # layer 1: GraphConvolutionSparse (relu) -> bf16 activations for next MXU pass
    hidden1 = gcn_layer(feat_bf16, w1, adj_bf16, tile=tile,
                        relu=True, out_dtype=jnp.bfloat16)

    # layers 2+3 fused: one adjacency pass produces [z_mean | z_std] in f32
    w23 = jnp.concatenate([params["w2"], params["w3"]], axis=1).astype(jnp.bfloat16)
    zms = gcn_layer(hidden1, w23, adj_bf16, tile=tile,
                    relu=False, out_dtype=jnp.float32)
    z_mean = zms[:n, :hidden2]
    z_std = zms[:n, hidden2:]

    # reparameterization ONCE in the wrapper (O(N*H2)); exp(0.5*z_std) == sqrt(exp(z_std))
    z = z_mean + eps * jnp.exp(0.5 * z_std)
    z_bf16 = _pad2(z.astype(jnp.bfloat16), n_pad, hidden2)

    # labels streamed as int8 (4x less HBM than f32); -1 marks padded entries
    labels_i8 = _pad2(labels.astype(jnp.int8), n_pad, n_pad, value=-1)

    num_blk = n_pad // tile
    partials = pl.pallas_call(
        functools.partial(_recon_loss_kernel, pos_weight=float(pos_weight)),
        out_shape=jax.ShapeDtypeStruct((num_blk, 2), jnp.float32),
        grid_spec=pltpu.PrefetchScalarGridSpec(
            num_scalar_prefetch=0,
            grid=(num_blk, num_blk),
            in_specs=[
                pl.BlockSpec((tile, tile), lambda i, j: (i, j)),      # labels tile
                pl.BlockSpec((tile, hidden2), lambda i, j: (i, 0)),   # z rows (q)
                pl.BlockSpec((tile, hidden2), lambda i, j: (j, 0)),   # z rows (k)
            ],
            out_specs=pl.BlockSpec((1, 2), lambda i, j: (i, 0),
                                   memory_space=pltpu.MemorySpace.SMEM),
            scratch_shapes=[pltpu.SMEM((2,), jnp.float32)],
        ),
        compiler_params=pltpu.CompilerParams(
            dimension_semantics=("parallel", "arbitrary"),   # i axis splits across TCs
            vmem_limit_bytes=VMEM_LIMIT_BYTES,
        ),
    )(labels_i8, z_bf16, z_bf16)

    total = float(n) * float(n)
    bce = jnp.sum(partials[:, 0]) / total
    accuracy = jnp.sum(partials[:, 1]) / total

    # KL / latent loss in plain JAX (O(N*hidden2)); mirrors the module's numpy math
    h2 = float(hidden2)
    a = 0.01 * np.ones((1, hidden2), np.float32)
    mu2 = jnp.asarray((np.log(a).T - np.mean(np.log(a), -1)).T, jnp.float32)
    var2 = jnp.asarray(((1.0 / a * (1.0 - 2.0 / h2)).T
                        + 1.0 / (h2 * h2) * np.sum(1.0 / a, -1)).T, jnp.float32)
    latent = (jnp.sum(jnp.exp(z_std) / var2, axis=-1)
              + jnp.sum(((mu2 - z_mean) / var2) * (mu2 - z_mean), axis=-1)
              - h2
              + jnp.sum(jnp.log(var2), axis=-1)
              - jnp.sum(z_std, axis=-1))
    kl = 0.5 / float(n) * jnp.mean(latent)

    cost = bce + kl
    return cost, accuracy, z_mean


# ---------------------------------------------------------------------------
if __name__ == "__main__":
    key = jax.random.PRNGKey(0)
    N, F, H1, H2 = 256, 64, 32, 16
    k1, k2, k3, k4, k5, k6 = jax.random.split(key, 6)

    # synthetic symmetric binary adjacency with self-loops (also serves as the
    # dense-ified sparse COO labels of the PyTorch code)
    raw = (jax.random.uniform(k1, (N, N)) < 0.05).astype(jnp.float32)
    adj_bin = jnp.clip(raw + raw.T + jnp.eye(N, dtype=jnp.float32), 0.0, 1.0)
    deg = jnp.sum(adj_bin, axis=1, keepdims=True)
    d_inv_sqrt = 1.0 / jnp.sqrt(deg)
    adj_norm = adj_bin * d_inv_sqrt * d_inv_sqrt.T   # symmetric-normalized adjacency

    features = jax.random.normal(k2, (N, F), jnp.float32)
    labels = adj_bin

    # deterministic glorot-style weight init (shapes from the module's __init__)
    params = {
        "w1": jax.random.normal(k3, (F, H1), jnp.float32) * (1.0 / jnp.sqrt(F)),
        "w2": jax.random.normal(k4, (H1, H2), jnp.float32) * (1.0 / jnp.sqrt(H1)),
        "w3": jax.random.normal(k5, (H1, H2), jnp.float32) * (1.0 / jnp.sqrt(H1)),
    }
    # reparameterization noise (torch.randn equivalent, generated in glue)
    eps = jax.random.normal(k6, (N, H2), jnp.float32)

    n_pos = float(jnp.sum(adj_bin))
    pos_weight = (N * N - n_pos) / n_pos

    cost, acc, z_mean = our_model_vae_forward(
        features, adj_norm, labels, params, eps, pos_weight, H2)
    jax.block_until_ready((cost, acc, z_mean))
    print("KERNEL_OK")
</pallas_src>

<mosaic_0001>
module attributes {stable_mosaic.version = 11 : i64} {
  func.func @_xw_kernel(%arg0: i32, %arg1: i32, %arg2: memref<256x128xbf16, #tpu.memory_space<vmem>>, %arg3: memref<128x32xbf16, #tpu.memory_space<vmem>>, %arg4: memref<256x32xbf16, #tpu.memory_space<vmem>>, %arg5: memref<256x32xf32, #tpu.memory_space<vmem>>) attributes {dimension_semantics = [#tpu.dimension_semantics<parallel>, #tpu.dimension_semantics<arbitrary>], iteration_bounds = array<i64: 1, 1>, scalar_prefetch = 0 : i64, scratch_operands = 1 : i64, tpu.core_type = #tpu.core_type<tc>, window_params = [{transform_indices = @transform_0, window_bounds = array<i64: 256, 128>}, {transform_indices = @transform_1, window_bounds = array<i64: 128, 32>}, {transform_indices = @transform_2, window_bounds = array<i64: 256, 32>}]} {
    %c0_i32 = arith.constant 0 : i32
    %0 = arith.cmpi eq, %arg1, %c0_i32 : i32
    %1 = arith.extui %0 : i1 to i32
    %c0_i32_0 = arith.constant 0 : i32
    %2 = arith.cmpi ne, %1, %c0_i32_0 : i32
    scf.if %2 {
      %cst_10 = arith.constant 0.000000e+00 : f32
      %12 = vector.broadcast %cst_10 : f32 to vector<256x32xf32>
      %c0_11 = arith.constant 0 : index
      %c0_12 = arith.constant 0 : index
      %13 = vector.load %arg5[%c0_11, %c0_12] : memref<256x32xf32, #tpu.memory_space<vmem>>, vector<256x32xf32>
      tpu.vector_store %arg5[%c0_11, %c0_12], %12 {strides = array<i32>} : memref<256x32xf32, #tpu.memory_space<vmem>>, vector<256x32xf32>,
    } else {
    }
    %c0 = arith.constant 0 : index
    %c0_1 = arith.constant 0 : index
    %3 = vector.load %arg5[%c0, %c0_1] : memref<256x32xf32, #tpu.memory_space<vmem>>, vector<256x32xf32>
    %c0_2 = arith.constant 0 : index
    %c0_3 = arith.constant 0 : index
    %4 = vector.load %arg2[%c0_2, %c0_3] : memref<256x128xbf16, #tpu.memory_space<vmem>>, vector<256x128xbf16>
    %c0_4 = arith.constant 0 : index
    %c0_5 = arith.constant 0 : index
    %5 = vector.load %arg3[%c0_4, %c0_5] : memref<128x32xbf16, #tpu.memory_space<vmem>>, vector<128x32xbf16>
    %cst = arith.constant dense<0.000000e+00> : vector<256x32xf32>
    %6 = tpu.matmul %4, %5, %cst {dimension_numbers = #tpu.dot_dimension_numbers<[1], [0], [0], [1], [0, 0, 1, 1], [], []>} : vector<256x128xbf16>, vector<128x32xbf16>, vector<256x32xf32> -> vector<256x32xf32>
    %7 = arith.addf %3, %6 : vector<256x32xf32>
    %c0_6 = arith.constant 0 : index
    %c0_7 = arith.constant 0 : index
    %8 = vector.load %arg5[%c0_6, %c0_7] : memref<256x32xf32, #tpu.memory_space<vmem>>, vector<256x32xf32>
    tpu.vector_store %arg5[%c0_6, %c0_7], %7 {strides = array<i32>} : memref<256x32xf32, #tpu.memory_space<vmem>>, vector<256x32xf32>,
    %c0_i32_8 = arith.constant 0 : i32
    %9 = arith.cmpi eq, %arg1, %c0_i32_8 : i32
    %10 = arith.extui %9 : i1 to i32
    %c0_i32_9 = arith.constant 0 : i32
    %11 = arith.cmpi ne, %10, %c0_i32_9 : i32
    scf.if %11 {
      %c0_10 = arith.constant 0 : index
      %c0_11 = arith.constant 0 : index
      %12 = vector.load %arg5[%c0_10, %c0_11] : memref<256x32xf32, #tpu.memory_space<vmem>>, vector<256x32xf32>
      %13 = arith.truncf %12 : vector<256x32xf32> to vector<256x32xbf16>
      %c0_12 = arith.constant 0 : index
      %c0_13 = arith.constant 0 : index
      %14 = vector.load %arg4[%c0_12, %c0_13] : memref<256x32xbf16, #tpu.memory_space<vmem>>, vector<256x32xbf16>
      tpu.vector_store %arg4[%c0_12, %c0_13], %13 {strides = array<i32>} : memref<256x32xbf16, #tpu.memory_space<vmem>>, vector<256x32xbf16>,
    } else {
    }
    return
  }
  func.func @transform_0(%arg0: i32, %arg1: i32) -> (i32, i32) {
    %c0_i32 = arith.constant 0 : i32
    return %arg0, %arg1 : i32, i32
  }
  func.func @transform_1(%arg0: i32, %arg1: i32) -> (i32, i32) {
    %c0_i32 = arith.constant 0 : i32
    %c0_i32_0 = arith.constant 0 : i32
    return %arg1, %c0_i32 : i32, i32
  }
  func.func @transform_2(%arg0: i32, %arg1: i32) -> (i32, i32) {
    %c0_i32 = arith.constant 0 : i32
    %c0_i32_0 = arith.constant 0 : i32
    return %arg0, %c0_i32 : i32, i32
  }
}

</mosaic_0001>

<llo_original>
// kernel: tpu_custom_call.1
$region0: #{tpu_custom_call.1}
  #allocation0 [shape = 'u32[]', space=smem, size = 0x4, offset = 0x4, fixed_abs, tag = 'smem constant byte address 0x4 - core index']
  #allocation1 [shape = 'u32[72,128]{1,0:T(1,128)}', space=vmem, size = 0x9000, scoped, tag = 'internal scratch']
  #allocation2 [shape = 'f32[256,32]{1,0:T(8,128)}', space=vmem, size = 0x20000, scoped, tag = 'scratch operand']
  %s0 = inlined_call_operand.hbm [shape: bf16[256,128], index: 0, kind: input, shape index: {}]
  %s1 = inlined_call_operand.vmem [shape: bf16[128,32], index: 1, kind: input, shape index: {}]
  %s2 = inlined_call_operand.vmem [shape: bf16[256,32], index: 2, kind: output, shape index: {}]
  %s3 = sld [smem:[#allocation0]]
  $region30: #{tpu_custom_call.1} parent=0
    _
  %s5 = ssub.s32 1, %s3
  %s6 = scalar_select 0, %s5, %s3
  $region1: #{tpu_custom_call.1} parent=0
    #allocation3 [shape = 'u8[65536]{0}', space=vmem, size = 0x10000, scoped, tag = 'input window, operand 0, single buffered']
    #allocation4 [shape = 's32[1]{0}', space=sflag, size = 0x4, scoped, tag = 'scoped memory for tpu_custom_call.1']
    %7 = vsyncpa [#allocation4], 0
    // Predicated region
    $region2: #{tpu_custom_call.1} parent=1 // pred_check
      _
    $region3: #{tpu_custom_call.1} parent=1 // pred_check_branch
      %9 = sbr.rel (0) target = $region5
    $region4: #{tpu_custom_call.1} parent=1 // pred_region
      %11 = vsyncadd [#allocation4], 0
      %s12 = sshll.u32 %s0, 4
      %s13 = int_to_ptr.hbm [resolvable:$true] %s12
      %s14 = sshll.u32 [#allocation3], 4
      %s15 = int_to_ptr.vmem [resolvable:$true] %s14
      %20 = dma.hbm_to_vmem [thread:$0]  %s13, 2048, %s15, [#allocation4], 64, 64, 4
    $region5: #{tpu_custom_call.1} parent=1 // pred_fallthru
      _
    // Predicated region
    $region6: #{tpu_custom_call.1} parent=1 // pred_check
      _
    $region7: #{tpu_custom_call.1} parent=1 // pred_check_branch
      %22 = sbr.rel (0) target = $region9
    $region8: #{tpu_custom_call.1} parent=1 // pred_region
      _
    $region9: #{tpu_custom_call.1} parent=1 // pred_fallthru
      _
    // Predicated region
    $region10: #{tpu_custom_call.1} parent=1 // pred_check
      _
    $region11: #{tpu_custom_call.1} parent=1 // pred_check_branch
      %24 = sbr.rel (0) target = $region13
    $region12: #{tpu_custom_call.1} parent=1 // pred_region
      %26 = dma.done [#allocation4], 2048
    $region13: #{tpu_custom_call.1} parent=1 // pred_fallthru
      _
    %p27 = scmp.eq.s32.totalorder 0, 0
    // Predicated region
    $region14: #{tpu_custom_call.1} parent=1 // pred_check
      %p28 = pneg %p27
    $region15: #{tpu_custom_call.1} parent=1 // pred_check_branch
      %30 = sbr.rel (%p28) target = $region17
    $region16: #{tpu_custom_call.1} parent=1 // pred_region
      %vm31 = vcmask 261120
      %32 = vst.msk [vmem:[#allocation2] sm:$0xff] %vm31, 0.0
      %33 = vst.msk [vmem:[#allocation2 + $0x8] sm:$0xff] %vm31, 0.0
      %34 = vst.msk [vmem:[#allocation2 + $0x10] sm:$0xff] %vm31, 0.0
      %35 = vst.msk [vmem:[#allocation2 + $0x18] sm:$0xff] %vm31, 0.0
      %36 = vst.msk [vmem:[#allocation2 + $0x20] sm:$0xff] %vm31, 0.0
      %37 = vst.msk [vmem:[#allocation2 + $0x28] sm:$0xff] %vm31, 0.0
      %38 = vst.msk [vmem:[#allocation2 + $0x30] sm:$0xff] %vm31, 0.0
      %39 = vst.msk [vmem:[#allocation2 + $0x38] sm:$0xff] %vm31, 0.0
      %40 = vst.msk [vmem:[#allocation2 + $0x40] sm:$0xff] %vm31, 0.0
      %41 = vst.msk [vmem:[#allocation2 + $0x48] sm:$0xff] %vm31, 0.0
      %42 = vst.msk [vmem:[#allocation2 + $0x50] sm:$0xff] %vm31, 0.0
      %43 = vst.msk [vmem:[#allocation2 + $0x58] sm:$0xff] %vm31, 0.0
      %44 = vst.msk [vmem:[#allocation2 + $0x60] sm:$0xff] %vm31, 0.0
      %45 = vst.msk [vmem:[#allocation2 + $0x68] sm:$0xff] %vm31, 0.0
      %46 = vst.msk [vmem:[#allocation2 + $0x70] sm:$0xff] %vm31, 0.0
      %47 = vst.msk [vmem:[#allocation2 + $0x78] sm:$0xff] %vm31, 0.0
      %48 = vst.msk [vmem:[#allocation2 + $0x80] sm:$0xff] %vm31, 0.0
      %49 = vst.msk [vmem:[#allocation2 + $0x88] sm:$0xff] %vm31, 0.0
      %50 = vst.msk [vmem:[#allocation2 + $0x90] sm:$0xff] %vm31, 0.0
      %51 = vst.msk [vmem:[#allocation2 + $0x98] sm:$0xff] %vm31, 0.0
      %52 = vst.msk [vmem:[#allocation2 + $0xa0] sm:$0xff] %vm31, 0.0
      %53 = vst.msk [vmem:[#allocation2 + $0xa8] sm:$0xff] %vm31, 0.0
      %54 = vst.msk [vmem:[#allocation2 + $0xb0] sm:$0xff] %vm31, 0.0
      %55 = vst.msk [vmem:[#allocation2 + $0xb8] sm:$0xff] %vm31, 0.0
      %56 = vst.msk [vmem:[#allocation2 + $0xc0] sm:$0xff] %vm31, 0.0
      %57 = vst.msk [vmem:[#allocation2 + $0xc8] sm:$0xff] %vm31, 0.0
      %58 = vst.msk [vmem:[#allocation2 + $0xd0] sm:$0xff] %vm31, 0.0
      %59 = vst.msk [vmem:[#allocation2 + $0xd8] sm:$0xff] %vm31, 0.0
      %60 = vst.msk [vmem:[#allocation2 + $0xe0] sm:$0xff] %vm31, 0.0
      %61 = vst.msk [vmem:[#allocation2 + $0xe8] sm:$0xff] %vm31, 0.0
      %62 = vst.msk [vmem:[#allocation2 + $0xf0] sm:$0xff] %vm31, 0.0
      %63 = vst.msk [vmem:[#allocation2 + $0xf8] sm:$0xff] %vm31, 0.0
    $region17: #{tpu_custom_call.1} parent=1 // pred_fallthru
      _
    %v64 = vld [vmem:[#allocation2] sm:$0xff]
    %v65 = vld [vmem:[#allocation2 + $0x8] sm:$0xff]
    %v66 = vld [vmem:[#allocation2 + $0x10] sm:$0xff]
    %v67 = vld [vmem:[#allocation2 + $0x18] sm:$0xff]
    %v68 = vld [vmem:[#allocation2 + $0x20] sm:$0xff]
    %v69 = vld [vmem:[#allocation2 + $0x28] sm:$0xff]
    %v70 = vld [vmem:[#allocation2 + $0x30] sm:$0xff]
    %v71 = vld [vmem:[#allocation2 + $0x38] sm:$0xff]
    %v72 = vld [vmem:[#allocation2 + $0x40] sm:$0xff]
    %v73 = vld [vmem:[#allocation2 + $0x48] sm:$0xff]
    %v74 = vld [vmem:[#allocation2 + $0x50] sm:$0xff]
    %v75 = vld [vmem:[#allocation2 + $0x58] sm:$0xff]
    %v76 = vld [vmem:[#allocation2 + $0x60] sm:$0xff]
    %v77 = vld [vmem:[#allocation2 + $0x68] sm:$0xff]
    %v78 = vld [vmem:[#allocation2 + $0x70] sm:$0xff]
    %v79 = vld [vmem:[#allocation2 + $0x78] sm:$0xff]
    %v80 = vld [vmem:[#allocation2 + $0x80] sm:$0xff]
    %v81 = vld [vmem:[#allocation2 + $0x88] sm:$0xff]
    %v82 = vld [vmem:[#allocation2 + $0x90] sm:$0xff]
    %v83 = vld [vmem:[#allocation2 + $0x98] sm:$0xff]
    %v84 = vld [vmem:[#allocation2 + $0xa0] sm:$0xff]
    %v85 = vld [vmem:[#allocation2 + $0xa8] sm:$0xff]
    %v86 = vld [vmem:[#allocation2 + $0xb0] sm:$0xff]
    %v87 = vld [vmem:[#allocation2 + $0xb8] sm:$0xff]
    %v88 = vld [vmem:[#allocation2 + $0xc0] sm:$0xff]
    %v89 = vld [vmem:[#allocation2 + $0xc8] sm:$0xff]
    %v90 = vld [vmem:[#allocation2 + $0xd0] sm:$0xff]
    %v91 = vld [vmem:[#allocation2 + $0xd8] sm:$0xff]
    %v92 = vld [vmem:[#allocation2 + $0xe0] sm:$0xff]
    %v93 = vld [vmem:[#allocation2 + $0xe8] sm:$0xff]
    %v94 = vld [vmem:[#allocation2 + $0xf0] sm:$0xff]
    %v95 = vld [vmem:[#allocation2 + $0xf8] sm:$0xff]
    %v96 = vld [vmem:[#allocation3] sm:$0xf]
    %v97 = vld [vmem:[#allocation3 + $0x4] sm:$0xf]
    %v98 = vld [vmem:[#allocation3 + $0x8] sm:$0xf]
    %v99 = vld [vmem:[#allocation3 + $0xc] sm:$0xf]
    %v100 = vld [vmem:[#allocation3 + $0x10] sm:$0xf]
    %v101 = vld [vmem:[#allocation3 + $0x14] sm:$0xf]
    %v102 = vld [vmem:[#allocation3 + $0x18] sm:$0xf]
    %v103 = vld [vmem:[#allocation3 + $0x1c] sm:$0xf]
    %v104 = vld [vmem:[#allocation3 + $0x20] sm:$0xf]
    %v105 = vld [vmem:[#allocation3 + $0x24] sm:$0xf]
    %v106 = vld [vmem:[#allocation3 + $0x28] sm:$0xf]
    %v107 = vld [vmem:[#allocation3 + $0x2c] sm:$0xf]
    %v108 = vld [vmem:[#allocation3 + $0x30] sm:$0xf]
    %v109 = vld [vmem:[#allocation3 + $0x34] sm:$0xf]
    %v110 = vld [vmem:[#allocation3 + $0x38] sm:$0xf]
    %v111 = vld [vmem:[#allocation3 + $0x3c] sm:$0xf]
    %v112 = vld [vmem:[#allocation3 + $0x40] sm:$0xf]
    %v113 = vld [vmem:[#allocation3 + $0x44] sm:$0xf]
    %v114 = vld [vmem:[#allocation3 + $0x48] sm:$0xf]
    %v115 = vld [vmem:[#allocation3 + $0x4c] sm:$0xf]
    %v116 = vld [vmem:[#allocation3 + $0x50] sm:$0xf]
    %v117 = vld [vmem:[#allocation3 + $0x54] sm:$0xf]
    %v118 = vld [vmem:[#allocation3 + $0x58] sm:$0xf]
    %v119 = vld [vmem:[#allocation3 + $0x5c] sm:$0xf]
    %v120 = vld [vmem:[#allocation3 + $0x60] sm:$0xf]
    %v121 = vld [vmem:[#allocation3 + $0x64] sm:$0xf]
    %v122 = vld [vmem:[#allocation3 + $0x68] sm:$0xf]
    %v123 = vld [vmem:[#allocation3 + $0x6c] sm:$0xf]
    %v124 = vld [vmem:[#allocation3 + $0x70] sm:$0xf]
    %v125 = vld [vmem:[#allocation3 + $0x74] sm:$0xf]
    %v126 = vld [vmem:[#allocation3 + $0x78] sm:$0xf]
    %v127 = vld [vmem:[#allocation3 + $0x7c] sm:$0xf]
    %v128 = vld [vmem:[%s1] sm:$0xf]
    %v129 = vld [vmem:[%s1 + $0x4] sm:$0xf]
    %v130 = vld [vmem:[%s1 + $0x8] sm:$0xf]
    %v131 = vld [vmem:[%s1 + $0xc] sm:$0xf]
    %v132 = vld [vmem:[%s1 + $0x10] sm:$0xf]
    %v133 = vld [vmem:[%s1 + $0x14] sm:$0xf]
    %v134 = vld [vmem:[%s1 + $0x18] sm:$0xf]
    %v135 = vld [vmem:[%s1 + $0x1c] sm:$0xf]
    %v136 = vld [vmem:[%s1 + $0x20] sm:$0xf]
    %v137 = vld [vmem:[%s1 + $0x24] sm:$0xf]
    %v138 = vld [vmem:[%s1 + $0x28] sm:$0xf]
    %v139 = vld [vmem:[%s1 + $0x2c] sm:$0xf]
    %v140 = vld [vmem:[%s1 + $0x30] sm:$0xf]
    %v141 = vld [vmem:[%s1 + $0x34] sm:$0xf]
    %v142 = vld [vmem:[%s1 + $0x38] sm:$0xf]
    %v143 = vld [vmem:[%s1 + $0x3c] sm:$0xf]
    %v176 = vunpack.c.l.b16 %v96
    %v177 = vunpack.c.l.b16 %v97
    %v178 = vunpack.c.l.b16 %v98
    %v179 = vunpack.c.l.b16 %v99
    %v180 = vunpack.c.l.b16 %v100
    %v181 = vunpack.c.l.b16 %v101
    %v182 = vunpack.c.l.b16 %v102
    %v183 = vunpack.c.l.b16 %v103
    %v184 = vunpack.c.l.b16 %v104
    %v185 = vunpack.c.l.b16 %v105
    %v186 = vunpack.c.l.b16 %v106
    %v187 = vunpack.c.l.b16 %v107
    %v188 = vunpack.c.l.b16 %v108
    %v189 = vunpack.c.l.b16 %v109
    %v190 = vunpack.c.l.b16 %v110
    %v191 = vunpack.c.l.b16 %v111
    %v192 = vunpack.c.l.b16 %v112
    %v193 = vunpack.c.l.b16 %v113
    %v194 = vunpack.c.l.b16 %v114
    %v195 = vunpack.c.l.b16 %v115
    %v196 = vunpack.c.l.b16 %v116
    %v197 = vunpack.c.l.b16 %v117
    %v198 = vunpack.c.l.b16 %v118
    %v199 = vunpack.c.l.b16 %v119
    %v200 = vunpack.c.l.b16 %v120
    %v201 = vunpack.c.l.b16 %v121
    %v202 = vunpack.c.l.b16 %v122
    %v203 = vunpack.c.l.b16 %v123
    %v204 = vunpack.c.l.b16 %v124
    %v205 = vunpack.c.l.b16 %v125
    %v206 = vunpack.c.l.b16 %v126
    %v207 = vunpack.c.l.b16 %v127
    %v208 = vpack.c.b16 %v177, %v176
    %v209 = vpack.c.b16 %v179, %v178
    %v210 = vpack.c.b16 %v181, %v180
    %v211 = vpack.c.b16 %v183, %v182
    %v212 = vpack.c.b16 %v185, %v184
    %v213 = vpack.c.b16 %v187, %v186
    %v214 = vpack.c.b16 %v189, %v188
    %v215 = vpack.c.b16 %v191, %v190
    %v216 = vpack.c.b16 %v193, %v192
    %v217 = vpack.c.b16 %v195, %v194
    %v218 = vpack.c.b16 %v197, %v196
    %v219 = vpack.c.b16 %v199, %v198
    %v220 = vpack.c.b16 %v201, %v200
    %v221 = vpack.c.b16 %v203, %v202
    %v222 = vpack.c.b16 %v205, %v204
    %v223 = vpack.c.b16 %v207, %v206
    %v256 = vunpack.c.l.b16 %v128
    %v257 = vunpack.c.l.b16 %v129
    %v258 = vunpack.c.l.b16 %v130
    %v259 = vunpack.c.l.b16 %v131
    %v260 = vunpack.c.l.b16 %v132
    %v261 = vunpack.c.l.b16 %v133
    %v262 = vunpack.c.l.b16 %v134
    %v263 = vunpack.c.l.b16 %v135
    %v264 = vunpack.c.l.b16 %v136
    %v265 = vunpack.c.l.b16 %v137
    %v266 = vunpack.c.l.b16 %v138
    %v267 = vunpack.c.l.b16 %v139
    %v268 = vunpack.c.l.b16 %v140
    %v269 = vunpack.c.l.b16 %v141
    %v270 = vunpack.c.l.b16 %v142
    %v271 = vunpack.c.l.b16 %v143
    %v272 = vpack.c.b16 %v257, %v256
    %v273 = vpack.c.b16 %v259, %v258
    %v274 = vpack.c.b16 %v261, %v260
    %v275 = vpack.c.b16 %v263, %v262
    %v276 = vpack.c.b16 %v265, %v264
    %v277 = vpack.c.b16 %v267, %v266
    %v278 = vpack.c.b16 %v269, %v268
    %v279 = vpack.c.b16 %v271, %v270
    %288 = vmatpush.bf16.msra.mxu0 %v279
    %289 = vmatpush.bf16.msra.mxu0 %v278
    %290 = vmatpush.bf16.msra.mxu0 %v277
    %291 = vmatpush.bf16.msra.mxu0 %v276
    %292 = vmatpush.bf16.msra.mxu0 %v275
    %293 = vmatpush.bf16.msra.mxu0 %v274
    %294 = vmatpush.bf16.msra.mxu0 %v273
    %295 = vmatpush.bf16.msra.mxu0 %v272
    %296 = vmatmul.bf16.gmra.mxu0 %v208
    %v297 = vpop.f32.mrf.mxu0
    %v298 = vadd.f32 0.0, %v297
    %v299 = vpop.f32.mrf.mxu0
    %v300 = vadd.f32 0.0, %v299
    %301 = vmatmul.bf16.gmra.mxu0 %v209
    %v302 = vpop.f32.mrf.mxu0
    %v303 = vadd.f32 0.0, %v302
    %v304 = vpop.f32.mrf.mxu0
    %v305 = vadd.f32 0.0, %v304
    %306 = vmatmul.bf16.gmra.mxu0 %v210
    %v307 = vpop.f32.mrf.mxu0
    %v308 = vadd.f32 0.0, %v307
    %v309 = vpop.f32.mrf.mxu0
    %v310 = vadd.f32 0.0, %v309
    %311 = vmatmul.bf16.gmra.mxu0 %v211
    %v312 = vpop.f32.mrf.mxu0
    %v313 = vadd.f32 0.0, %v312
    %v314 = vpop.f32.mrf.mxu0
    %v315 = vadd.f32 0.0, %v314
    %316 = vmatmul.bf16.gmra.mxu0 %v212
    %v317 = vpop.f32.mrf.mxu0
    %v318 = vadd.f32 0.0, %v317
    %v319 = vpop.f32.mrf.mxu0
    %v320 = vadd.f32 0.0, %v319
    %321 = vmatmul.bf16.gmra.mxu0 %v213
    %v322 = vpop.f32.mrf.mxu0
    %v323 = vadd.f32 0.0, %v322
    %v324 = vpop.f32.mrf.mxu0
    %v325 = vadd.f32 0.0, %v324
    %326 = vmatmul.bf16.gmra.mxu0 %v214
    %v327 = vpop.f32.mrf.mxu0
    %v328 = vadd.f32 0.0, %v327
    %v329 = vpop.f32.mrf.mxu0
    %v330 = vadd.f32 0.0, %v329
    %331 = vmatmul.bf16.gmra.mxu0 %v215
    %v332 = vpop.f32.mrf.mxu0
    %v333 = vadd.f32 0.0, %v332
    %v334 = vpop.f32.mrf.mxu0
    %v335 = vadd.f32 0.0, %v334
    %336 = vmatmul.bf16.gmra.mxu0 %v216
    %v337 = vpop.f32.mrf.mxu0
    %v338 = vadd.f32 0.0, %v337
    %v339 = vpop.f32.mrf.mxu0
    %v340 = vadd.f32 0.0, %v339
    %341 = vmatmul.bf16.gmra.mxu0 %v217
    %v342 = vpop.f32.mrf.mxu0
    %v343 = vadd.f32 0.0, %v342
    %v344 = vpop.f32.mrf.mxu0
    %v345 = vadd.f32 0.0, %v344
    %346 = vmatmul.bf16.gmra.mxu0 %v218
    %v347 = vpop.f32.mrf.mxu0
    %v348 = vadd.f32 0.0, %v347
    %v349 = vpop.f32.mrf.mxu0
    %v350 = vadd.f32 0.0, %v349
    %351 = vmatmul.bf16.gmra.mxu0 %v219
    %v352 = vpop.f32.mrf.mxu0
    %v353 = vadd.f32 0.0, %v352
    %v354 = vpop.f32.mrf.mxu0
    %v355 = vadd.f32 0.0, %v354
    %356 = vmatmul.bf16.gmra.mxu0 %v220
    %v357 = vpop.f32.mrf.mxu0
    %v358 = vadd.f32 0.0, %v357
    %v359 = vpop.f32.mrf.mxu0
    %v360 = vadd.f32 0.0, %v359
    %361 = vmatmul.bf16.gmra.mxu0 %v221
    %v362 = vpop.f32.mrf.mxu0
    %v363 = vadd.f32 0.0, %v362
    %v364 = vpop.f32.mrf.mxu0
    %v365 = vadd.f32 0.0, %v364
    %366 = vmatmul.bf16.gmra.mxu0 %v222
    %v367 = vpop.f32.mrf.mxu0
    %v368 = vadd.f32 0.0, %v367
    %v369 = vpop.f32.mrf.mxu0
    %v370 = vadd.f32 0.0, %v369
    %371 = vmatmul.bf16.gmra.mxu0 %v223
    %v372 = vpop.f32.mrf.mxu0
    %v373 = vadd.f32 0.0, %v372
    %v374 = vpop.f32.mrf.mxu0
    %v375 = vadd.f32 0.0, %v374
    %376 = vdwg.mxu0
    %v377 = vadd.f32 %v64, %v298
    %v378 = vadd.f32 %v65, %v300
    %v379 = vadd.f32 %v66, %v303
    %v380 = vadd.f32 %v67, %v305
    %v381 = vadd.f32 %v68, %v308
    %v382 = vadd.f32 %v69, %v310
    %v383 = vadd.f32 %v70, %v313
    %v384 = vadd.f32 %v71, %v315
    %v385 = vadd.f32 %v72, %v318
    %v386 = vadd.f32 %v73, %v320
    %v387 = vadd.f32 %v74, %v323
    %v388 = vadd.f32 %v75, %v325
    %v389 = vadd.f32 %v76, %v328
    %v390 = vadd.f32 %v77, %v330
    %v391 = vadd.f32 %v78, %v333
    %v392 = vadd.f32 %v79, %v335
    %v393 = vadd.f32 %v80, %v338
    %v394 = vadd.f32 %v81, %v340
    %v395 = vadd.f32 %v82, %v343
    %v396 = vadd.f32 %v83, %v345
    %v397 = vadd.f32 %v84, %v348
    %v398 = vadd.f32 %v85, %v350
    %v399 = vadd.f32 %v86, %v353
    %v400 = vadd.f32 %v87, %v355
    %v401 = vadd.f32 %v88, %v358
    %v402 = vadd.f32 %v89, %v360
    %v403 = vadd.f32 %v90, %v363
    %v404 = vadd.f32 %v91, %v365
    %v405 = vadd.f32 %v92, %v368
    %v406 = vadd.f32 %v93, %v370
    %v407 = vadd.f32 %v94, %v373
    %v408 = vadd.f32 %v95, %v375
    %vm409 = vcmask 261120
    %410 = vst.msk [vmem:[#allocation2] sm:$0xff] %vm409, %v377
    %411 = vst.msk [vmem:[#allocation2 + $0x8] sm:$0xff] %vm409, %v378
    %412 = vst.msk [vmem:[#allocation2 + $0x10] sm:$0xff] %vm409, %v379
    %413 = vst.msk [vmem:[#allocation2 + $0x18] sm:$0xff] %vm409, %v380
    %414 = vst.msk [vmem:[#allocation2 + $0x20] sm:$0xff] %vm409, %v381
    %415 = vst.msk [vmem:[#allocation2 + $0x28] sm:$0xff] %vm409, %v382
    %416 = vst.msk [vmem:[#allocation2 + $0x30] sm:$0xff] %vm409, %v383
    %417 = vst.msk [vmem:[#allocation2 + $0x38] sm:$0xff] %vm409, %v384
    %418 = vst.msk [vmem:[#allocation2 + $0x40] sm:$0xff] %vm409, %v385
    %419 = vst.msk [vmem:[#allocation2 + $0x48] sm:$0xff] %vm409, %v386
    %420 = vst.msk [vmem:[#allocation2 + $0x50] sm:$0xff] %vm409, %v387
    %421 = vst.msk [vmem:[#allocation2 + $0x58] sm:$0xff] %vm409, %v388
    %422 = vst.msk [vmem:[#allocation2 + $0x60] sm:$0xff] %vm409, %v389
    %423 = vst.msk [vmem:[#allocation2 + $0x68] sm:$0xff] %vm409, %v390
    %424 = vst.msk [vmem:[#allocation2 + $0x70] sm:$0xff] %vm409, %v391
    %425 = vst.msk [vmem:[#allocation2 + $0x78] sm:$0xff] %vm409, %v392
    %426 = vst.msk [vmem:[#allocation2 + $0x80] sm:$0xff] %vm409, %v393
    %427 = vst.msk [vmem:[#allocation2 + $0x88] sm:$0xff] %vm409, %v394
    %428 = vst.msk [vmem:[#allocation2 + $0x90] sm:$0xff] %vm409, %v395
    %429 = vst.msk [vmem:[#allocation2 + $0x98] sm:$0xff] %vm409, %v396
    %430 = vst.msk [vmem:[#allocation2 + $0xa0] sm:$0xff] %vm409, %v397
    %431 = vst.msk [vmem:[#allocation2 + $0xa8] sm:$0xff] %vm409, %v398
    %432 = vst.msk [vmem:[#allocation2 + $0xb0] sm:$0xff] %vm409, %v399
    %433 = vst.msk [vmem:[#allocation2 + $0xb8] sm:$0xff] %vm409, %v400
    %434 = vst.msk [vmem:[#allocation2 + $0xc0] sm:$0xff] %vm409, %v401
    %435 = vst.msk [vmem:[#allocation2 + $0xc8] sm:$0xff] %vm409, %v402
    %436 = vst.msk [vmem:[#allocation2 + $0xd0] sm:$0xff] %vm409, %v403
    %437 = vst.msk [vmem:[#allocation2 + $0xd8] sm:$0xff] %vm409, %v404
    %438 = vst.msk [vmem:[#allocation2 + $0xe0] sm:$0xff] %vm409, %v405
    %439 = vst.msk [vmem:[#allocation2 + $0xe8] sm:$0xff] %vm409, %v406
    %440 = vst.msk [vmem:[#allocation2 + $0xf0] sm:$0xff] %vm409, %v407
    %441 = vst.msk [vmem:[#allocation2 + $0xf8] sm:$0xff] %vm409, %v408
    // Predicated region
    $region18: #{tpu_custom_call.1} parent=1 // pred_check
      %p442 = pneg %p27
    $region19: #{tpu_custom_call.1} parent=1 // pred_check_branch
      %444 = sbr.rel (%p442) target = $region21
    $region20: #{tpu_custom_call.1} parent=1 // pred_region
      %v445 = vld [vmem:[#allocation2] sm:$0xff]
      %v446 = vld [vmem:[#allocation2 + $0x8] sm:$0xff]
      %v447 = vld [vmem:[#allocation2 + $0x10] sm:$0xff]
      %v448 = vld [vmem:[#allocation2 + $0x18] sm:$0xff]
      %v449 = vld [vmem:[#allocation2 + $0x20] sm:$0xff]
      %v450 = vld [vmem:[#allocation2 + $0x28] sm:$0xff]
      %v451 = vld [vmem:[#allocation2 + $0x30] sm:$0xff]
      %v452 = vld [vmem:[#allocation2 + $0x38] sm:$0xff]
      %v453 = vld [vmem:[#allocation2 + $0x40] sm:$0xff]
      %v454 = vld [vmem:[#allocation2 + $0x48] sm:$0xff]
      %v455 = vld [vmem:[#allocation2 + $0x50] sm:$0xff]
      %v456 = vld [vmem:[#allocation2 + $0x58] sm:$0xff]
      %v457 = vld [vmem:[#allocation2 + $0x60] sm:$0xff]
      %v458 = vld [vmem:[#allocation2 + $0x68] sm:$0xff]
      %v459 = vld [vmem:[#allocation2 + $0x70] sm:$0xff]
      %v460 = vld [vmem:[#allocation2 + $0x78] sm:$0xff]
      %v461 = vld [vmem:[#allocation2 + $0x80] sm:$0xff]
      %v462 = vld [vmem:[#allocation2 + $0x88] sm:$0xff]
      %v463 = vld [vmem:[#allocation2 + $0x90] sm:$0xff]
      %v464 = vld [vmem:[#allocation2 + $0x98] sm:$0xff]
      %v465 = vld [vmem:[#allocation2 + $0xa0] sm:$0xff]
      %v466 = vld [vmem:[#allocation2 + $0xa8] sm:$0xff]
      %v467 = vld [vmem:[#allocation2 + $0xb0] sm:$0xff]
      %v468 = vld [vmem:[#allocation2 + $0xb8] sm:$0xff]
      %v469 = vld [vmem:[#allocation2 + $0xc0] sm:$0xff]
      %v470 = vld [vmem:[#allocation2 + $0xc8] sm:$0xff]
      %v471 = vld [vmem:[#allocation2 + $0xd0] sm:$0xff]
      %v472 = vld [vmem:[#allocation2 + $0xd8] sm:$0xff]
      %v473 = vld [vmem:[#allocation2 + $0xe0] sm:$0xff]
      %v474 = vld [vmem:[#allocation2 + $0xe8] sm:$0xff]
      %v475 = vld [vmem:[#allocation2 + $0xf0] sm:$0xff]
      %v476 = vld [vmem:[#allocation2 + $0xf8] sm:$0xff]
      %v477 = vpack.c.bf16 %v445, %v445
      %v478 = vpack.c.bf16 %v446, %v446
      %v479 = vpack.c.bf16 %v447, %v447
      %v480 = vpack.c.bf16 %v448, %v448
      %v481 = vpack.c.bf16 %v449, %v449
      %v482 = vpack.c.bf16 %v450, %v450
      %v483 = vpack.c.bf16 %v451, %v451
      %v484 = vpack.c.bf16 %v452, %v452
      %v485 = vpack.c.bf16 %v453, %v453
      %v486 = vpack.c.bf16 %v454, %v454
      %v487 = vpack.c.bf16 %v455, %v455
      %v488 = vpack.c.bf16 %v456, %v456
      %v489 = vpack.c.bf16 %v457, %v457
      %v490 = vpack.c.bf16 %v458, %v458
      %v491 = vpack.c.bf16 %v459, %v459
      %v492 = vpack.c.bf16 %v460, %v460
      %v493 = vpack.c.bf16 %v461, %v461
      %v494 = vpack.c.bf16 %v462, %v462
      %v495 = vpack.c.bf16 %v463, %v463
      %v496 = vpack.c.bf16 %v464, %v464
      %v497 = vpack.c.bf16 %v465, %v465
      %v498 = vpack.c.bf16 %v466, %v466
      %v499 = vpack.c.bf16 %v467, %v467
      %v500 = vpack.c.bf16 %v468, %v468
      %v501 = vpack.c.bf16 %v469, %v469
      %v502 = vpack.c.bf16 %v470, %v470
      %v503 = vpack.c.bf16 %v471, %v471
      %v504 = vpack.c.bf16 %v472, %v472
      %v505 = vpack.c.bf16 %v473, %v473
      %v506 = vpack.c.bf16 %v474, %v474
      %v507 = vpack.c.bf16 %v475, %v475
      %v508 = vpack.c.bf16 %v476, %v476
      %vm509 = vcmask 257024
      %510 = vst.msk [vmem:[%s2] sm:$0xf] %vm509, %v477
      %511 = vst.msk [vmem:[%s2 + $0x4] sm:$0xf] %vm509, %v478
      %512 = vst.msk [vmem:[%s2 + $0x8] sm:$0xf] %vm509, %v479
      %513 = vst.msk [vmem:[%s2 + $0xc] sm:$0xf] %vm509, %v480
      %514 = vst.msk [vmem:[%s2 + $0x10] sm:$0xf] %vm509, %v481
      %515 = vst.msk [vmem:[%s2 + $0x14] sm:$0xf] %vm509, %v482
      %516 = vst.msk [vmem:[%s2 + $0x18] sm:$0xf] %vm509, %v483
      %517 = vst.msk [vmem:[%s2 + $0x1c] sm:$0xf] %vm509, %v484
      %518 = vst.msk [vmem:[%s2 + $0x20] sm:$0xf] %vm509, %v485
      %519 = vst.msk [vmem:[%s2 + $0x24] sm:$0xf] %vm509, %v486
      %520 = vst.msk [vmem:[%s2 + $0x28] sm:$0xf] %vm509, %v487
      %521 = vst.msk [vmem:[%s2 + $0x2c] sm:$0xf] %vm509, %v488
      %522 = vst.msk [vmem:[%s2 + $0x30] sm:$0xf] %vm509, %v489
      %523 = vst.msk [vmem:[%s2 + $0x34] sm:$0xf] %vm509, %v490
      %524 = vst.msk [vmem:[%s2 + $0x38] sm:$0xf] %vm509, %v491
      %525 = vst.msk [vmem:[%s2 + $0x3c] sm:$0xf] %vm509, %v492
      %526 = vst.msk [vmem:[%s2 + $0x40] sm:$0xf] %vm509, %v493
      %527 = vst.msk [vmem:[%s2 + $0x44] sm:$0xf] %vm509, %v494
      %528 = vst.msk [vmem:[%s2 + $0x48] sm:$0xf] %vm509, %v495
      %529 = vst.msk [vmem:[%s2 + $0x4c] sm:$0xf] %vm509, %v496
      %530 = vst.msk [vmem:[%s2 + $0x50] sm:$0xf] %vm509, %v497
      %531 = vst.msk [vmem:[%s2 + $0x54] sm:$0xf] %vm509, %v498
      %532 = vst.msk [vmem:[%s2 + $0x58] sm:$0xf] %vm509, %v499
      %533 = vst.msk [vmem:[%s2 + $0x5c] sm:$0xf] %vm509, %v500
      %534 = vst.msk [vmem:[%s2 + $0x60] sm:$0xf] %vm509, %v501
      %535 = vst.msk [vmem:[%s2 + $0x64] sm:$0xf] %vm509, %v502
      %536 = vst.msk [vmem:[%s2 + $0x68] sm:$0xf] %vm509, %v503
      %537 = vst.msk [vmem:[%s2 + $0x6c] sm:$0xf] %vm509, %v504
      %538 = vst.msk [vmem:[%s2 + $0x70] sm:$0xf] %vm509, %v505
      %539 = vst.msk [vmem:[%s2 + $0x74] sm:$0xf] %vm509, %v506
      %540 = vst.msk [vmem:[%s2 + $0x78] sm:$0xf] %vm509, %v507
      %541 = vst.msk [vmem:[%s2 + $0x7c] sm:$0xf] %vm509, %v508
    $region21: #{tpu_custom_call.1} parent=1 // pred_fallthru
      _
    // Predicated region
    $region22: #{tpu_custom_call.1} parent=1 // pred_check
      _
    $region23: #{tpu_custom_call.1} parent=1 // pred_check_branch
      %543 = sbr.rel (0) target = $region25
    $region24: #{tpu_custom_call.1} parent=1 // pred_region
      _
    $region25: #{tpu_custom_call.1} parent=1 // pred_fallthru
      _
    // Predicated region
    $region26: #{tpu_custom_call.1} parent=1 // pred_check
      _
    $region27: #{tpu_custom_call.1} parent=1 // pred_check_branch
      %545 = sbr.rel (0) target = $region29
    $region28: #{tpu_custom_call.1} parent=1 // pred_region
      _
    $region29: #{tpu_custom_call.1} parent=1 // pred_fallthru
      _
    %546 = vsyncpa [#allocation4], 1

</llo_original>
